<compile_context>
chip_gen: v5e
topology: v5e:2x2
jax: 0.10.0
libtpu: 0.0.40
codegen_flags: <defaults>
</compile_context>

<pallas_src>
import functools

import jax
import jax.numpy as jnp
from jax.experimental import pallas as pl
from jax.experimental.pallas import tpu as pltpu


_EPS = 1e-12  # F.normalize clamps the L2 norm at this value.


def _round_up(x, m):
    return ((x + m - 1) // m) * m


# -----------------------------------------------------------------------------
# Kernel 1: inverse row L2 norms.  x: (R, F) -> (R, 1)
#   inv[r] = 1 / max(||x[r]||, eps)  ==  rsqrt(max(sum(x[r]^2), eps^2))
# -----------------------------------------------------------------------------
def _inv_rownorm_kernel(x_ref, o_ref, acc_ref):
    k = pl.program_id(1)

    @pl.when(k == 0)
    def _():
        acc_ref[...] = jnp.zeros_like(acc_ref)

    x = x_ref[...].astype(jnp.float32)
    acc_ref[...] += jnp.sum(x * x, axis=-1, keepdims=True)

    @pl.when(k == pl.num_programs(1) - 1)
    def _():
        # Single EUP rsqrt instead of sqrt -> maximum -> divide.
        o_ref[...] = jax.lax.rsqrt(jnp.maximum(acc_ref[...], _EPS * _EPS))


def _inverse_row_norms(x, *, tr, tk):
    r, f = x.shape
    return pl.pallas_call(
        _inv_rownorm_kernel,
        out_shape=jax.ShapeDtypeStruct((r, 1), jnp.float32),
        grid=(r // tr, f // tk),
        in_specs=[pl.BlockSpec((tr, tk), lambda i, k: (i, k))],
        out_specs=pl.BlockSpec((tr, 1), lambda i, k: (i, 0)),
        scratch_shapes=[pltpu.VMEM((tr, 1), jnp.float32)],
        compiler_params=pltpu.CompilerParams(
            dimension_semantics=("parallel", "arbitrary")
        ),
    )(x)


# -----------------------------------------------------------------------------
# Kernel 2: tiled matmul with epilogue inverse-norm scaling.
#   out[i, j] = (x @ W.T)[i, j] * inv_xnorm[i] * inv_wnorm[j]
# -----------------------------------------------------------------------------
def _fcnorm_matmul_kernel(x_ref, w_ref, ix_ref, iw_ref, o_ref, acc_ref, *, use_bf16):
    k = pl.program_id(2)

    @pl.when(k == 0)
    def _():
        acc_ref[...] = jnp.zeros_like(acc_ref)

    x = x_ref[...]
    w = w_ref[...]
    if use_bf16:
        x = x.astype(jnp.bfloat16)
        w = w.astype(jnp.bfloat16)

    # Contract the lane (last) dims of both operands directly: (tm,tk)x(tn,tk)
    # -> (tm,tn) on the MXU, f32 accumulation, no W transpose materialized.
    acc_ref[...] += jax.lax.dot_general(
        x,
        w,
        dimension_numbers=(((1,), (1,)), ((), ())),
        preferred_element_type=jnp.float32,
    )

    @pl.when(k == pl.num_programs(2) - 1)
    def _():
        # O(tm*tn) epilogue: row scale (tm,1) and column scale (1,tn).
        o_ref[...] = (acc_ref[...] * ix_ref[...] * iw_ref[...]).astype(o_ref.dtype)


def fcnorm_forward(x, weight, *, tm=None, tn=None, tk=None, use_bf16=False):
    """out = normalize(x) @ normalize(weight).T ; x:(N,F), weight:(C,F) -> (N,C)."""
    n, f = x.shape
    c, f2 = weight.shape
    assert f == f2, "feature dims must match"

    # Tile sizes: sublane dims multiples of 8, lane dims multiples of 128.
    # Defaults keep double-buffered pipeline buffers + f32 accumulator well
    # under the default scoped VMEM limit on v5e/v6e/v7x.
    if tm is None:
        tm = min(256, _round_up(n, 8))
    if tn is None:
        tn = min(256, _round_up(c, 128))   # lane-dense output tile
    if tk is None:
        tk = min(512, _round_up(f, 128))

    n_p, c_p, f_p = _round_up(n, tm), _round_up(c, tn), _round_up(f, tk)

    x_p = x if (n_p == n and f_p == f) else jnp.pad(x, ((0, n_p - n), (0, f_p - f)))
    w_p = (
        weight
        if (c_p == c and f_p == f)
        else jnp.pad(weight, ((0, c_p - c), (0, f_p - f)))
    )

    # Cheap O(N*F) / O(C*F) passes; padded (all-zero) rows get inv = 1/eps but
    # multiply a zero accumulator, so padded outputs stay 0 and are sliced off.
    inv_x = _inverse_row_norms(x_p, tr=tm, tk=tk)   # (n_p, 1)
    inv_w = _inverse_row_norms(w_p, tr=tn, tk=tk)   # (c_p, 1)
    inv_w_row = inv_w.reshape(1, c_p)               # (1, c_p), lane-dense

    grid = (n_p // tm, c_p // tn, f_p // tk)

    out_p = pl.pallas_call(
        functools.partial(_fcnorm_matmul_kernel, use_bf16=use_bf16),
        out_shape=jax.ShapeDtypeStruct((n_p, c_p), jnp.float32),
        grid=grid,
        in_specs=[
            pl.BlockSpec((tm, tk), lambda i, j, k: (i, k)),  # x tile
            pl.BlockSpec((tn, tk), lambda i, j, k: (j, k)),  # W tile (row-major)
            pl.BlockSpec((tm, 1), lambda i, j, k: (i, 0)),   # inv row norms of x
            pl.BlockSpec((1, tn), lambda i, j, k: (0, j)),   # inv row norms of W
        ],
        out_specs=pl.BlockSpec((tm, tn), lambda i, j, k: (i, j)),
        scratch_shapes=[pltpu.VMEM((tm, tn), jnp.float32)],
        compiler_params=pltpu.CompilerParams(
            dimension_semantics=("parallel", "parallel", "arbitrary")
        ),
    )(x_p, w_p, inv_x, inv_w_row)

    return out_p[:n, :c]


# -----------------------------------------------------------------------------
# Parameter init & pure-JAX reference (mirror the PyTorch module).
# -----------------------------------------------------------------------------
def init_fcnorm_weight(key, num_classes, num_features):
    """torch.FloatTensor(C, F).uniform_(-1, 1).renorm_(2, 1, 1e-5).mul_(1e5)

    renorm_(p=2, dim=1, maxnorm=1e-5): each sub-tensor along dim 1 (each
    column, shape (C,)) is rescaled so its 2-norm is <= 1e-5.
    """
    maxnorm = 1e-5
    w = jax.random.uniform(
        key, (num_classes, num_features), dtype=jnp.float32, minval=-1.0, maxval=1.0
    )
    col_norm = jnp.linalg.norm(w, axis=0, keepdims=True)  # (1, F)
    scale = jnp.where(col_norm > maxnorm, maxnorm / (col_norm + 1e-7), 1.0)
    return w * scale * 1e5


def fcnorm_reference(x, weight):
    xn = x / jnp.maximum(jnp.linalg.norm(x, axis=-1, keepdims=True), _EPS)
    wn = weight / jnp.maximum(jnp.linalg.norm(weight, axis=-1, keepdims=True), _EPS)
    return xn @ wn.T


if __name__ == "__main__":
    key = jax.random.PRNGKey(0)
    k_w1, k_x1, k_w2, k_x2 = jax.random.split(key, 4)

    # --- Test 1: module-scale small shapes (single-tile grid) ---------------
    num_features, num_classes, batch = 32, 16, 8
    weight = init_fcnorm_weight(k_w1, num_classes, num_features)
    x = jax.random.normal(k_x1, (batch, num_features), dtype=jnp.float32)

    out = jax.block_until_ready(fcnorm_forward(x, weight))
    ref = fcnorm_reference(x, weight)
    assert out.shape == (batch, num_classes)
    assert jnp.allclose(out, ref, atol=1e-5, rtol=1e-5), "mismatch vs reference (small)"

    # --- Test 2: exercises the multi-tile grid + padding paths ---------------
    num_features2, num_classes2, batch2 = 640, 272, 24
    weight2 = init_fcnorm_weight(k_w2, num_classes2, num_features2)
    x2 = jax.random.normal(k_x2, (batch2, num_features2), dtype=jnp.float32)

    out2 = jax.block_until_ready(fcnorm_forward(x2, weight2))
    ref2 = fcnorm_reference(x2, weight2)
    assert out2.shape == (batch2, num_classes2)
    assert jnp.allclose(out2, ref2, atol=1e-4, rtol=1e-4), "mismatch vs reference (tiled)"

    print("KERNEL_OK")
</pallas_src>

<mosaic_0001>
module attributes {stable_mosaic.version = 11 : i64} {
  func.func @_inv_rownorm_kernel(%arg0: i32, %arg1: i32, %arg2: memref<8x128xf32, #tpu.memory_space<vmem>>, %arg3: memref<8x1xf32, #tpu.memory_space<vmem>>, %arg4: memref<8x1xf32, #tpu.memory_space<vmem>>) attributes {dimension_semantics = [#tpu.dimension_semantics<parallel>, #tpu.dimension_semantics<arbitrary>], iteration_bounds = array<i64: 1, 1>, scalar_prefetch = 0 : i64, scratch_operands = 1 : i64, tpu.core_type = #tpu.core_type<tc>, window_params = [{transform_indices = @transform_0, window_bounds = array<i64: 8, 128>}, {transform_indices = @transform_1, window_bounds = array<i64: 8, 1>}]} {
    %c0_i32 = arith.constant 0 : i32
    %0 = arith.cmpi eq, %arg1, %c0_i32 : i32
    %1 = arith.extui %0 : i1 to i32
    %c0_i32_0 = arith.constant 0 : i32
    %2 = arith.cmpi ne, %1, %c0_i32_0 : i32
    scf.if %2 {
      %cst_8 = arith.constant 0.000000e+00 : f32
      %13 = vector.broadcast %cst_8 : f32 to vector<8x1xf32>
      %c0_9 = arith.constant 0 : index
      %c0_10 = arith.constant 0 : index
      %14 = vector.load %arg4[%c0_9, %c0_10] : memref<8x1xf32, #tpu.memory_space<vmem>>, vector<8x1xf32>
      tpu.vector_store %arg4[%c0_9, %c0_10], %13 {strides = array<i32>} : memref<8x1xf32, #tpu.memory_space<vmem>>, vector<8x1xf32>,
    } else {
    }
    %c0 = arith.constant 0 : index
    %c0_1 = arith.constant 0 : index
    %3 = vector.load %arg2[%c0, %c0_1] : memref<8x128xf32, #tpu.memory_space<vmem>>, vector<8x128xf32>
    %c0_2 = arith.constant 0 : index
    %c0_3 = arith.constant 0 : index
    %4 = vector.load %arg4[%c0_2, %c0_3] : memref<8x1xf32, #tpu.memory_space<vmem>>, vector<8x1xf32>
    %5 = arith.mulf %3, %3 : vector<8x128xf32>
    %cst = arith.constant dense<0.000000e+00> : vector<8xf32>
    %6 = vector.multi_reduction <add>, %5, %cst [1] : vector<8x128xf32> to vector<8xf32>
    %7 = vector.shape_cast %6 : vector<8xf32> to vector<8x1xf32>
    %8 = arith.addf %4, %7 : vector<8x1xf32>
    %c0_4 = arith.constant 0 : index
    %c0_5 = arith.constant 0 : index
    %9 = vector.load %arg4[%c0_4, %c0_5] : memref<8x1xf32, #tpu.memory_space<vmem>>, vector<8x1xf32>
    tpu.vector_store %arg4[%c0_4, %c0_5], %8 {strides = array<i32>} : memref<8x1xf32, #tpu.memory_space<vmem>>, vector<8x1xf32>,
    %c0_i32_6 = arith.constant 0 : i32
    %10 = arith.cmpi eq, %arg1, %c0_i32_6 : i32
    %11 = arith.extui %10 : i1 to i32
    %c0_i32_7 = arith.constant 0 : i32
    %12 = arith.cmpi ne, %11, %c0_i32_7 : i32
    scf.if %12 {
      %c0_8 = arith.constant 0 : index
      %c0_9 = arith.constant 0 : index
      %13 = vector.load %arg4[%c0_8, %c0_9] : memref<8x1xf32, #tpu.memory_space<vmem>>, vector<8x1xf32>
      %cst_10 = arith.constant 1.000000e-24 : f32
      %14 = vector.broadcast %cst_10 : f32 to vector<8x1xf32>
      %15 = arith.maximumf %13, %14 : vector<8x1xf32>
      %16 = math.rsqrt %15 : vector<8x1xf32>
      %c0_11 = arith.constant 0 : index
      %c0_12 = arith.constant 0 : index
      %17 = vector.load %arg3[%c0_11, %c0_12] : memref<8x1xf32, #tpu.memory_space<vmem>>, vector<8x1xf32>
      tpu.vector_store %arg3[%c0_11, %c0_12], %16 {strides = array<i32>} : memref<8x1xf32, #tpu.memory_space<vmem>>, vector<8x1xf32>,
    } else {
    }
    return
  }
  func.func @transform_0(%arg0: i32, %arg1: i32) -> (i32, i32) {
    %c0_i32 = arith.constant 0 : i32
    return %arg0, %arg1 : i32, i32
  }
  func.func @transform_1(%arg0: i32, %arg1: i32) -> (i32, i32) {
    %c0_i32 = arith.constant 0 : i32
    %c0_i32_0 = arith.constant 0 : i32
    return %arg0, %c0_i32 : i32, i32
  }
}

</mosaic_0001>

<llo_original>
// kernel: tpu_custom_call.1
$region0: #{tpu_custom_call.1}
  #allocation0 [shape = 'u32[]', space=smem, size = 0x4, offset = 0x4, fixed_abs, tag = 'smem constant byte address 0x4 - core index']
  #allocation1 [shape = 'u32[72,128]{1,0:T(1,128)}', space=vmem, size = 0x9000, scoped, tag = 'internal scratch']
  #allocation2 [shape = 'f32[8,1]{1,0:T(8,128)}', space=vmem, size = 0x1000, scoped, tag = 'scratch operand']
  %s0 = inlined_call_operand.hbm [shape: f32[8,128], index: 0, kind: input, shape index: {}]
  %s1 = inlined_call_operand.vmem [shape: f32[8,1], index: 1, kind: output, shape index: {}]
  %s2 = sld [smem:[#allocation0]]
  $region26: #{tpu_custom_call.1} parent=0
    _
  %s4 = ssub.s32 1, %s2
  %s5 = scalar_select 0, %s4, %s2
  $region1: #{tpu_custom_call.1} parent=0
    #allocation3 [shape = 'u8[4096]{0}', space=vmem, size = 0x1000, scoped, tag = 'input window, operand 0, single buffered']
    #allocation4 [shape = 's32[1]{0}', space=sflag, size = 0x4, scoped, tag = 'scoped memory for tpu_custom_call.1']
    %6 = vsyncpa [#allocation4], 0
    // Predicated region
    $region2: #{tpu_custom_call.1} parent=1 // pred_check
      _
    $region3: #{tpu_custom_call.1} parent=1 // pred_check_branch
      %8 = sbr.rel (0) target = $region5
    $region4: #{tpu_custom_call.1} parent=1 // pred_region
      %10 = vsyncadd [#allocation4], 0
      %s12 = sshll.u32 %s0, 4
      %s13 = int_to_ptr.hbm [resolvable:$true] %s12
      %s14 = sshll.u32 [#allocation3], 4
      %s15 = int_to_ptr.vmem [resolvable:$true] %s14
      %17 = dma.hbm_to_vmem [thread:$0]  %s13, 128, %s15, [#allocation4]
    $region5: #{tpu_custom_call.1} parent=1 // pred_fallthru
      _
    // Predicated region
    $region6: #{tpu_custom_call.1} parent=1 // pred_check
      _
    $region7: #{tpu_custom_call.1} parent=1 // pred_check_branch
      %19 = sbr.rel (0) target = $region9
    $region8: #{tpu_custom_call.1} parent=1 // pred_region
      %21 = dma.done [#allocation4], 128
    $region9: #{tpu_custom_call.1} parent=1 // pred_fallthru
      _
    %p22 = scmp.eq.s32.totalorder 0, 0
    // Predicated region
    $region10: #{tpu_custom_call.1} parent=1 // pred_check
      %p23 = pneg %p22
    $region11: #{tpu_custom_call.1} parent=1 // pred_check_branch
      %25 = sbr.rel (%p23) target = $region13
    $region12: #{tpu_custom_call.1} parent=1 // pred_region
      %vm26 = vcmask 7168
      %27 = vst.msk [vmem:[#allocation2] sm:$0xff] %vm26, 0.0
    $region13: #{tpu_custom_call.1} parent=1 // pred_fallthru
      _
    %v28 = vld [vmem:[#allocation3] sm:$0xff]
    %v29 = vld [vmem:[#allocation2] sm:$0xff]
    %v30 = vmul.f32 %v28, %v28
    %31 = vadd.xlane.f32.xlu0 %v30
    %v32 = vpop.xlane.xlu0 %31
    %v33 = vadd.f32 %v29, %v32
    %vm34 = vcmask 7168
    %35 = vst.msk [vmem:[#allocation2] sm:$0xff] %vm34, %v33
    // Predicated region
    $region14: #{tpu_custom_call.1} parent=1 // pred_check
      %p36 = pneg %p22
    $region15: #{tpu_custom_call.1} parent=1 // pred_check_branch
      %38 = sbr.rel (%p36) target = $region17
    $region16: #{tpu_custom_call.1} parent=1 // pred_region
      %v39 = vld [vmem:[#allocation2] sm:$0xff]
      %v40 = vmax.f32 %v39, 1e-24
      %v41 = vrsqrt.pop %v40
      %v42 = vmul.f32 %v41, %v40
      %v43 = vmul.f32 %v42, %v41
      %v44 = vmul.f32 0.5, %v43
      %v45 = vsub.f32 1.5, %v44
      %v46 = vmul.f32 %v41, %v45
      %vm47 = vweird.f32 %v40
      %vm48 = vweird.f32 %v41
      %vm49 = vmor %vm47, %vm48
      %v50 = vsel %vm49, %v41, %v46
      %51 = vst.msk [vmem:[%s1] sm:$0xff] %vm34, %v50
    $region17: #{tpu_custom_call.1} parent=1 // pred_fallthru
      _
    // Predicated region
    $region18: #{tpu_custom_call.1} parent=1 // pred_check
      _
    $region19: #{tpu_custom_call.1} parent=1 // pred_check_branch
      %53 = sbr.rel (0) target = $region21
    $region20: #{tpu_custom_call.1} parent=1 // pred_region
      _
    $region21: #{tpu_custom_call.1} parent=1 // pred_fallthru
      _
    // Predicated region
    $region22: #{tpu_custom_call.1} parent=1 // pred_check
      _
    $region23: #{tpu_custom_call.1} parent=1 // pred_check_branch
      %55 = sbr.rel (0) target = $region25
    $region24: #{tpu_custom_call.1} parent=1 // pred_region
      _
    $region25: #{tpu_custom_call.1} parent=1 // pred_fallthru
      _
    %56 = vsyncpa [#allocation4], 1

</llo_original>
